<compile_context>
chip_gen: v6e
topology: v6e:2x2x1
jax: 0.10.0
libtpu: 0.0.40
codegen_flags: <defaults>
</compile_context>

<pallas_src>
import functools
import math

import jax
import jax.numpy as jnp
from jax import lax
from jax.experimental import pallas as pl
from jax.experimental.pallas import tpu as pltpu


def _round_up(x, n):
    return ((x + n - 1) // n) * n


def _add_margin_kernel(feat_ref, wt_ref, inv_w_ref, inv_fs_ref, label_ref,
                       out_ref, *, s, m):
    """One (batch-tile, class-tile) block of  s*cos(theta) - s*m*one_hot."""
    jc = pl.program_id(0)  # class-tile index (outer, streamed axis)

    # MXU: bf16 x bf16 -> f32 accumulate.  (TB, D) x (D, TC) = (TB, TC).
    raw = jnp.dot(feat_ref[...], wt_ref[...],
                  preferred_element_type=jnp.float32)

    # cosine * s, realized as raw * (s/||f||) * (1/||w||): two broadcast muls,
    # no normalized operand copies, norms precomputed in f32 in the wrapper.
    scaled = (raw * inv_fs_ref[...]) * inv_w_ref[...]

    # Fused margin: subtract s*m only on the label class of each row.  Class
    # iota is offset by the class-tile origin so every tile is correct.
    tb, tc = out_ref.shape
    cls_idx = lax.broadcasted_iota(jnp.int32, (tb, tc), 1) + jc * tc
    one_hot = cls_idx == label_ref[...]                       # (TB,1)->(TB,TC)
    out_ref[...] = (scaled - jnp.where(one_hot, s * m, 0.0)).astype(out_ref.dtype)


def add_margin_product(feature, weight, label, *, s=30.0, m=0.4,
                       block_b=None, block_c=None, eps=1e-12):
    """feature (B, D) f32, weight (C, D) f32, label (B,) int -> (B, C) f32."""
    B, D = feature.shape
    C, D2 = weight.shape
    assert D == D2

    # --- tile sizes -------------------------------------------------------
    # Full batch resident by default (feature fetched from HBM exactly once).
    if block_b is None:
        block_b = B
    assert B % block_b == 0
    assert block_b == B or block_b % 8 == 0
    n_b = B // block_b

    # Classes: lane-dense 128-aligned tiles; pad C up rather than ever using a
    # whole-C block.  Default 1024 keeps the double-buffered working set small
    # on every generation (v7x's 64 MiB VMEM included).
    if block_c is None:
        block_c = 1024
    block_c = max(128, _round_up(block_c, 128))
    block_c = min(block_c, _round_up(C, 128))
    C_pad = _round_up(C, block_c)
    n_c = C_pad // block_c

    # --- one-time f32 prep in the wrapper ---------------------------------
    f32 = feature.astype(jnp.float32)
    w32 = weight.astype(jnp.float32)

    # F.normalize semantics: x / max(||x||, eps) == x * rsqrt(max(||x||^2, eps^2)).
    # Fold s into the per-row factor (saves one full-size mul per tile).
    f_nsq = jnp.sum(f32 * f32, axis=1, keepdims=True)                  # (B, 1)
    inv_fs = (s * lax.rsqrt(jnp.maximum(f_nsq, eps * eps))).astype(jnp.float32)

    w_nsq = jnp.sum(w32 * w32, axis=1)                                 # (C,)
    inv_w = lax.rsqrt(jnp.maximum(w_nsq, eps * eps))
    if C_pad != C:
        inv_w = jnp.concatenate([inv_w, jnp.ones((C_pad - C,), jnp.float32)])
    inv_w = inv_w.reshape(1, C_pad)

    # (C, D) -> (D, C_pad) bf16: plain MXU matmul, no per-step transpose,
    # half the weight HBM bytes.  Padded columns are zero -> zero outputs.
    weight_t = w32.T.astype(jnp.bfloat16)
    if C_pad != C:
        weight_t = jnp.pad(weight_t, ((0, 0), (0, C_pad - C)))

    feat_bf16 = f32.astype(jnp.bfloat16)
    label2d = label.reshape(B, 1).astype(jnp.int32)

    kernel = functools.partial(_add_margin_kernel, s=float(s), m=float(m))

    cost = pl.CostEstimate(
        flops=2 * B * C_pad * D,
        transcendentals=0,
        bytes_accessed=(B * D * 2 + D * C_pad * 2        # bf16 operands
                        + B * C_pad * 4                  # f32 output
                        + C_pad * 4 + 2 * B * 4),        # norms + labels
    )

    out = pl.pallas_call(
        kernel,
        out_shape=jax.ShapeDtypeStruct((B, C_pad), jnp.float32),
        grid_spec=pltpu.PrefetchScalarGridSpec(
            num_scalar_prefetch=0,
            grid=(n_c, n_b),  # classes outer (streamed / parallel), batch inner
            in_specs=[
                pl.BlockSpec((block_b, D), lambda jc, ib: (ib, 0)),   # feature bf16
                pl.BlockSpec((D, block_c), lambda jc, ib: (0, jc)),   # weight^T bf16
                pl.BlockSpec((1, block_c), lambda jc, ib: (0, jc)),   # 1/||w_c||
                pl.BlockSpec((block_b, 1), lambda jc, ib: (ib, 0)),   # s/||f_b||
                pl.BlockSpec((block_b, 1), lambda jc, ib: (ib, 0)),   # label
            ],
            out_specs=pl.BlockSpec((block_b, block_c), lambda jc, ib: (ib, jc)),
        ),
        compiler_params=pltpu.CompilerParams(
            # TODO(synk): on v7x, profile and switch the class axis to
            # pltpu.CORE_PARALLEL if one TensorCore sits idle.
            dimension_semantics=("parallel", "arbitrary"),
            vmem_limit_bytes=48 * 1024 * 1024,  # fits v7x's 64 MiB, ample on v5e/v6e
        ),
        cost_estimate=cost,
    )(feat_bf16, weight_t, inv_w, inv_fs, label2d)

    return out if C_pad == C else out[:, :C]


def _xavier_uniform(key, out_features, in_features):
    # nn.init.xavier_uniform_ for a (out, in) weight: U(-a, a),
    # a = sqrt(6 / (fan_in + fan_out))
    a = math.sqrt(6.0 / (in_features + out_features))
    return jax.random.uniform(
        key, (out_features, in_features), jnp.float32, minval=-a, maxval=a)


if __name__ == "__main__":
    B, D, C = 8, 32, 300          # batch, in_features, out_features
    s, m = 30.0, 0.4

    key = jax.random.PRNGKey(0)
    k_feat, k_w, k_lbl = jax.random.split(key, 3)

    feature = jax.random.normal(k_feat, (B, D), jnp.float32)
    weight = _xavier_uniform(k_w, C, D)
    label = jax.random.randint(k_lbl, (B,), 0, C, jnp.int32)

    # block_c=128 with C=300 -> C_pad=384, 3 class tiles: exercises tiling,
    # the iota offset, the padded columns, and the output slice.
    out = add_margin_product(feature, weight, label, s=s, m=m, block_c=128)
    out = jax.block_until_ready(out)

    # Pure-JAX reference (PyTorch semantics, full f32).
    fn = feature / jnp.maximum(
        jnp.linalg.norm(feature, axis=1, keepdims=True), 1e-12)
    wn = weight / jnp.maximum(
        jnp.linalg.norm(weight, axis=1, keepdims=True), 1e-12)
    cosine = jnp.dot(fn, wn.T, precision=lax.Precision.HIGHEST)
    one_hot = jax.nn.one_hot(label, C, dtype=jnp.float32)
    ref = (one_hot * (cosine - m) + (1.0 - one_hot) * cosine) * s

    assert out.shape == (B, C)
    # bf16 MXU operands on s=30-scaled cosines -> tolerance loosened vs f32.
    assert jnp.allclose(out, ref, atol=0.15, rtol=0.0), \
        float(jnp.max(jnp.abs(out - ref)))

    print("KERNEL_OK")
</pallas_src>

<mosaic_0001>
module attributes {stable_mosaic.version = 11 : i64} {
  func.func @_add_margin_kernel(%arg0: i32, %arg1: i32, %arg2: memref<8x32xbf16, #tpu.memory_space<vmem>>, %arg3: memref<32x128xbf16, #tpu.memory_space<vmem>>, %arg4: memref<1x128xf32, #tpu.memory_space<vmem>>, %arg5: memref<8x1xf32, #tpu.memory_space<vmem>>, %arg6: memref<8x1xi32, #tpu.memory_space<vmem>>, %arg7: memref<8x128xf32, #tpu.memory_space<vmem>>) attributes {dimension_semantics = [#tpu.dimension_semantics<parallel>, #tpu.dimension_semantics<arbitrary>], iteration_bounds = array<i64: 3, 1>, scalar_prefetch = 0 : i64, scratch_operands = 0 : i64, tpu.core_type = #tpu.core_type<tc>, window_params = [{transform_indices = @transform_0, window_bounds = array<i64: 8, 32>}, {transform_indices = @transform_1, window_bounds = array<i64: 32, 128>}, {transform_indices = @transform_2, window_bounds = array<i64: 1, 128>}, {transform_indices = @transform_3, window_bounds = array<i64: 8, 1>}, {transform_indices = @transform_4, window_bounds = array<i64: 8, 1>}, {transform_indices = @transform_5, window_bounds = array<i64: 8, 128>}]} {
    %c0 = arith.constant 0 : index
    %c0_0 = arith.constant 0 : index
    %0 = vector.load %arg2[%c0, %c0_0] : memref<8x32xbf16, #tpu.memory_space<vmem>>, vector<8x32xbf16>
    %c0_1 = arith.constant 0 : index
    %c0_2 = arith.constant 0 : index
    %1 = vector.load %arg3[%c0_1, %c0_2] : memref<32x128xbf16, #tpu.memory_space<vmem>>, vector<32x128xbf16>
    %cst = arith.constant dense<0.000000e+00> : vector<8x128xf32>
    %2 = tpu.matmul %0, %1, %cst {dimension_numbers = #tpu.dot_dimension_numbers<[1], [0], [0], [1], [0, 0, 1, 1], [], []>} : vector<8x32xbf16>, vector<32x128xbf16>, vector<8x128xf32> -> vector<8x128xf32>
    %c0_3 = arith.constant 0 : index
    %c0_4 = arith.constant 0 : index
    %3 = vector.load %arg5[%c0_3, %c0_4] : memref<8x1xf32, #tpu.memory_space<vmem>>, vector<8x1xf32>
    %4 = vector.broadcast %3 : vector<8x1xf32> to vector<8x128xf32>
    %5 = arith.mulf %2, %4 : vector<8x128xf32>
    %c0_5 = arith.constant 0 : index
    %c0_6 = arith.constant 0 : index
    %6 = vector.load %arg4[%c0_5, %c0_6] : memref<1x128xf32, #tpu.memory_space<vmem>>, vector<1x128xf32>
    %7 = vector.broadcast %6 : vector<1x128xf32> to vector<8x128xf32>
    %8 = arith.mulf %5, %7 : vector<8x128xf32>
    %9 = tpu.iota {dimensions = array<i32: 1>} : vector<8x128xi32>
    %c128_i32 = arith.constant 128 : i32
    %10 = arith.muli %arg0, %c128_i32 : i32
    %11 = vector.broadcast %10 : i32 to vector<8x128xi32>
    %12 = arith.addi %9, %11 : vector<8x128xi32>
    %c0_7 = arith.constant 0 : index
    %c0_8 = arith.constant 0 : index
    %13 = vector.load %arg6[%c0_7, %c0_8] : memref<8x1xi32, #tpu.memory_space<vmem>>, vector<8x1xi32>
    %14 = vector.broadcast %13 : vector<8x1xi32> to vector<8x128xi32>
    %15 = arith.cmpi eq, %12, %14 : vector<8x128xi32>
    %cst_9 = arith.constant 1.200000e+01 : f32
    %cst_10 = arith.constant 0.000000e+00 : f32
    %16 = vector.broadcast %cst_9 : f32 to vector<8x128xf32>
    %17 = vector.broadcast %cst_10 : f32 to vector<8x128xf32>
    %18 = arith.select %15, %16, %17 : vector<8x128xi1>, vector<8x128xf32>
    %19 = arith.subf %8, %18 : vector<8x128xf32>
    %c0_11 = arith.constant 0 : index
    %c0_12 = arith.constant 0 : index
    %20 = vector.load %arg7[%c0_11, %c0_12] : memref<8x128xf32, #tpu.memory_space<vmem>>, vector<8x128xf32>
    tpu.vector_store %arg7[%c0_11, %c0_12], %19 {strides = array<i32>} : memref<8x128xf32, #tpu.memory_space<vmem>>, vector<8x128xf32>,
    return
  }
  func.func @transform_0(%arg0: i32, %arg1: i32) -> (i32, i32) {
    %c0_i32 = arith.constant 0 : i32
    %c0_i32_0 = arith.constant 0 : i32
    return %arg1, %c0_i32 : i32, i32
  }
  func.func @transform_1(%arg0: i32, %arg1: i32) -> (i32, i32) {
    %c0_i32 = arith.constant 0 : i32
    %c0_i32_0 = arith.constant 0 : i32
    return %c0_i32, %arg0 : i32, i32
  }
  func.func @transform_2(%arg0: i32, %arg1: i32) -> (i32, i32) {
    %c0_i32 = arith.constant 0 : i32
    %c0_i32_0 = arith.constant 0 : i32
    return %c0_i32, %arg0 : i32, i32
  }
  func.func @transform_3(%arg0: i32, %arg1: i32) -> (i32, i32) {
    %c0_i32 = arith.constant 0 : i32
    %c0_i32_0 = arith.constant 0 : i32
    return %arg1, %c0_i32 : i32, i32
  }
  func.func @transform_4(%arg0: i32, %arg1: i32) -> (i32, i32) {
    %c0_i32 = arith.constant 0 : i32
    %c0_i32_0 = arith.constant 0 : i32
    return %arg1, %c0_i32 : i32, i32
  }
  func.func @transform_5(%arg0: i32, %arg1: i32) -> (i32, i32) {
    %c0_i32 = arith.constant 0 : i32
    return %arg1, %arg0 : i32, i32
  }
}

</mosaic_0001>

<llo_original>
// kernel: tpu_custom_call.1
$region0: #{tpu_custom_call.1}
  #allocation0 [shape = 'u32[]', space=smem, size = 0x4, offset = 0x4, fixed_abs, tag = 'smem constant byte address 0x4 - core index']
  #allocation1 [shape = 'u32[144,128]{1,0:T(1,128)}', space=vmem, size = 0x12000, scoped, tag = 'internal scratch']
  %s0 = inlined_call_operand.vmem [shape: bf16[8,32], index: 0, kind: input, shape index: {}]
  %s1 = inlined_call_operand.hbm [shape: bf16[32,384], index: 1, kind: input, shape index: {}]
  %s2 = inlined_call_operand.vmem [shape: f32[1,384], index: 2, kind: input, shape index: {}]
  %s3 = inlined_call_operand.vmem [shape: f32[8,1], index: 3, kind: input, shape index: {}]
  %s4 = inlined_call_operand.vmem [shape: s32[8,1], index: 4, kind: input, shape index: {}]
  %s5 = inlined_call_operand.hbm [shape: f32[8,384], index: 5, kind: output, shape index: {}]
  %s6 = sld [smem:[#allocation0]]
  $region57: #{tpu_custom_call.1} parent=0
    _
  %s8 = ssub.s32 1, %s6
  %s9 = scalar_select 0, %s8, %s6
  $region1: #{tpu_custom_call.1} parent=0
    #allocation2 [shape = 'u8[16384]{0}', space=vmem, size = 0x4000, scoped, tag = 'input window, operand 1']
    #allocation3 [shape = 's32[2]{0}', space=sflag, size = 0x8, scoped, tag = 'scoped memory for tpu_custom_call.1']
    #allocation4 [shape = 's32[2]{0}', space=sflag, size = 0x8, scoped, tag = 'scoped memory for tpu_custom_call.1']
    #allocation5 [shape = 'u8[8192]{0}', space=vmem, size = 0x2000, scoped, tag = 'output window, operand 0']
    %10 = vsyncpa [#allocation3], 0
    %s11 = scalar_lea.sflag [#allocation3], 1
    %12 = vsyncpa %s11, 0
    %13 = vsyncpa [#allocation4], 0
    %s14 = scalar_lea.sflag [#allocation4], 1
    %15 = vsyncpa %s14, 0
    loop: start=0, step=1, limit=5
    $region2: #{tpu_custom_call.1} parent=1 // loop_pre_header
      _
    $region3: #{tpu_custom_call.1} parent=1 // loop_header
      %s17 = sphi 0, %s21
      %p18 = scmp.ge.s32.totalorder %s17, 5
      %s24 = sphi 0, %s36
      %s25 = sphi 0, %s32
      %s26 = sphi 0, %s24
      %s27 = sphi 0, %s25
      %s28 = sphi 0, %s26
      %s29 = sphi 0, %s27
      %s39 = sphi 0, %s41
      %s42 = sphi 0, %s39
      %s43 = sphi 0, %s42
      %s59 = sphi 0, %s43
      %s65 = sphi 0, %s67
      %s68 = sphi 0, %s65
      %s69 = sphi 0, %s68
      %s85 = sphi 0, %s69
      %s91 = sphi 0, %s93
      %s94 = sphi 0, %s91
      %s95 = sphi 0, %s94
      %s111 = sphi 0, %s95
      %s117 = sphi 0, %s119
      %s120 = sphi 0, %s117
      %s121 = sphi 0, %s120
      %s137 = sphi 0, %s121
      %s143 = sphi 0, %s145
      %s146 = sphi 0, %s143
      %s147 = sphi 0, %s146
      %s163 = sphi 0, %s147
      %s171 = sphi 0, %s173
      %s174 = sphi 0, %s171
      %s175 = sphi 0, %s174
      %s191 = sphi 0, %s175
    $region4: #{tpu_custom_call.1} parent=1 // loop_header_branch
      %20 = sbr.rel (%p18) target = $region8
    $region5: #{tpu_custom_call.1} parent=1 // loop_body
      %s22 = ssub.s32 %s17, 1
      %s23 = ssub.s32 %s17, 2
      %s30 = sadd.s32 1, %s25
      %p31 = scmp.ge.s32.totalorder %s30, 1
      %s32 = scalar_select %p31, 0, %s30
      %s33 = sadd.s32 1, %s24
      %s34 = scalar_select %p31, %s33, %s24
      %p35 = scmp.ge.s32.totalorder %s34, 3
      %s36 = scalar_select %p35, 0, %s34
      %s37 = ssub.s32 %s25, %s32
      %p38 = scmp.eq.s32.totalorder %s37, 0
      %s40 = sadd.s32 %s39, 1
      %s41 = scalar_select %p38, %s39, %s40
      %p44 = pneg %p38
      %p45 = scmp.eq.s32.totalorder %s17, 2
      %p46 = por %p44, %p45
      %p47 = scmp.ne.s32.totalorder %s39, %s42
      %p48 = scmp.eq.s32.totalorder %s17, 0
      %p49 = por %p47, %p48
      %p50 = scmp.ne.s32.totalorder %s39, %s42
      %p51 = scmp.eq.s32.totalorder %s22, 2
      %p52 = por %p50, %p51
      %p53 = scmp.ne.s32.totalorder %s42, %s43
      %p54 = scmp.eq.s32.totalorder %s22, 0
      %p55 = por %p53, %p54
      %p56 = scmp.ne.s32.totalorder %s42, %s43
      %p57 = scmp.eq.s32.totalorder %s23, 2
      %p58 = por %p56, %p57
      %p60 = scmp.ne.s32.totalorder %s43, %s59
      %p61 = scmp.eq.s32.totalorder %s23, 0
      %p62 = por %p60, %p61
      %s63 = ssub.s32 %s24, %s36
      %p64 = scmp.eq.s32.totalorder %s63, 0
      %s66 = sadd.s32 %s65, 1
      %s67 = scalar_select %p64, %s65, %s66
      %p70 = pneg %p64
      %p71 = scmp.eq.s32.totalorder %s17, 2
      %p72 = por %p70, %p71
      %p73 = scmp.ne.s32.totalorder %s65, %s68
      %p74 = scmp.eq.s32.totalorder %s17, 0
      %p75 = por %p73, %p74
      %p76 = scmp.ne.s32.totalorder %s65, %s68
      %p77 = scmp.eq.s32.totalorder %s22, 2
      %p78 = por %p76, %p77
      %p79 = scmp.ne.s32.totalorder %s68, %s69
      %p80 = scmp.eq.s32.totalorder %s22, 0
      %p81 = por %p79, %p80
      %p82 = scmp.ne.s32.totalorder %s68, %s69
      %p83 = scmp.eq.s32.totalorder %s23, 2
      %p84 = por %p82, %p83
      %p86 = scmp.ne.s32.totalorder %s69, %s85
      %p87 = scmp.eq.s32.totalorder %s23, 0
      %p88 = por %p86, %p87
      %s89 = ssub.s32 %s24, %s36
      %p90 = scmp.eq.s32.totalorder %s89, 0
      %s92 = sadd.s32 %s91, 1
      %s93 = scalar_select %p90, %s91, %s92
      %p96 = pneg %p90
      %p97 = scmp.eq.s32.totalorder %s17, 2
      %p98 = por %p96, %p97
      %p99 = scmp.ne.s32.totalorder %s91, %s94
      %p100 = scmp.eq.s32.totalorder %s17, 0
      %p101 = por %p99, %p100
      %p102 = scmp.ne.s32.totalorder %s91, %s94
      %p103 = scmp.eq.s32.totalorder %s22, 2
      %p104 = por %p102, %p103
      %p105 = scmp.ne.s32.totalorder %s94, %s95
      %p106 = scmp.eq.s32.totalorder %s22, 0
      %p107 = por %p105, %p106
      %p108 = scmp.ne.s32.totalorder %s94, %s95
      %p109 = scmp.eq.s32.totalorder %s23, 2
      %p110 = por %p108, %p109
      %p112 = scmp.ne.s32.totalorder %s95, %s111
      %p113 = scmp.eq.s32.totalorder %s23, 0
      %p114 = por %p112, %p113
      %s115 = ssub.s32 %s25, %s32
      %p116 = scmp.eq.s32.totalorder %s115, 0
      %s118 = sadd.s32 %s117, 1
      %s119 = scalar_select %p116, %s117, %s118
      %p122 = pneg %p116
      %p123 = scmp.eq.s32.totalorder %s17, 2
      %p124 = por %p122, %p123
      %p125 = scmp.ne.s32.totalorder %s117, %s120
      %p126 = scmp.eq.s32.totalorder %s17, 0
      %p127 = por %p125, %p126
      %p128 = scmp.ne.s32.totalorder %s117, %s120
      %p129 = scmp.eq.s32.totalorder %s22, 2
      %p130 = por %p128, %p129
      %p131 = scmp.ne.s32.totalorder %s120, %s121
      %p132 = scmp.eq.s32.totalorder %s22, 0
      %p133 = por %p131, %p132
      %p134 = scmp.ne.s32.totalorder %s120, %s121
      %p135 = scmp.eq.s32.totalorder %s23, 2
      %p136 = por %p134, %p135
      %p138 = scmp.ne.s32.totalorder %s121, %s137
      %p139 = scmp.eq.s32.totalorder %s23, 0
      %p140 = por %p138, %p139
      %s141 = ssub.s32 %s25, %s32
      %p142 = scmp.eq.s32.totalorder %s141, 0
      %s144 = sadd.s32 %s143, 1
      %s145 = scalar_select %p142, %s143, %s144
      %p148 = pneg %p142
      %p149 = scmp.eq.s32.totalorder %s17, 2
      %p150 = por %p148, %p149
      %p151 = scmp.ne.s32.totalorder %s143, %s146
      %p152 = scmp.eq.s32.totalorder %s17, 0
      %p153 = por %p151, %p152
      %p154 = scmp.ne.s32.totalorder %s143, %s146
      %p155 = scmp.eq.s32.totalorder %s22, 2
      %p156 = por %p154, %p155
      %p157 = scmp.ne.s32.totalorder %s146, %s147
      %p158 = scmp.eq.s32.totalorder %s22, 0
      %p159 = por %p157, %p158
      %p160 = scmp.ne.s32.totalorder %s146, %s147
      %p161 = scmp.eq.s32.totalorder %s23, 2
      %p162 = por %p160, %p161
      %p164 = scmp.ne.s32.totalorder %s147, %s163
      %p165 = scmp.eq.s32.totalorder %s23, 0
      %p166 = por %p164, %p165
      %s167 = ssub.s32 %s25, %s32
      %s168 = ssub.s32 %s24, %s36
      %s169 = sor.u32 %s167, %s168
      %p170 = scmp.eq.s32.totalorder %s169, 0
      %s172 = sadd.s32 %s171, 1
      %s173 = scalar_select %p170, %s171, %s172
      %p176 = pneg %p170
      %p177 = scmp.eq.s32.totalorder %s17, 2
      %p178 = por %p176, %p177
      %p179 = scmp.ne.s32.totalorder %s171, %s174
      %p180 = scmp.eq.s32.totalorder %s17, 0
      %p181 = por %p179, %p180
      %p182 = scmp.ne.s32.totalorder %s171, %s174
      %p183 = scmp.eq.s32.totalorder %s22, 2
      %p184 = por %p182, %p183
      %p185 = scmp.ne.s32.totalorder %s174, %s175
      %p186 = scmp.eq.s32.totalorder %s22, 0
      %p187 = por %p185, %p186
      %p188 = scmp.ne.s32.totalorder %s174, %s175
      %p189 = scmp.eq.s32.totalorder %s23, 2
      %p190 = por %p188, %p189
      %p192 = scmp.ne.s32.totalorder %s175, %s191
      %p193 = scmp.eq.s32.totalorder %s23, 0
      %p194 = por %p192, %p193
      %p195 = scmp.le.s32.totalorder 1, %s17
      %p196 = scmp.lt.s32.totalorder %s17, 4
      %p197 = pnand %p195, %p196
      %p198 = pneg %p197
      // Predicated region
      $region9: #{tpu_custom_call.1} parent=5 // pred_check
        _
      $region10: #{tpu_custom_call.1} parent=5 // pred_check_branch
        %200 = sbr.rel (%p197) target = $region12
      $region11: #{tpu_custom_call.1} parent=5 // pred_region
        %s201 = ssub.s32 %s17, 1
        // Predicated region
        $region13: #{tpu_custom_call.1} parent=11 // pred_check
          %p202 = pneg %p55
        $region14: #{tpu_custom_call.1} parent=11 // pred_check_branch
          %204 = sbr.rel (%p202) target = $region16
        $region15: #{tpu_custom_call.1} parent=11 // pred_region
          %p205 = scmp.lt.s32.totalorder %s27, 0
          %s206 = scalar_select %p205, %s27, 0
          %s207 = smul.addr %s206, 4
          %s208 = scalar_lea.vmem %s0, %s207
        $region16: #{tpu_custom_call.1} parent=11 // pred_fallthru
          _
        // Predicated region
        $region17: #{tpu_custom_call.1} parent=11 // pred_check
          %p209 = pneg %p133
        $region18: #{tpu_custom_call.1} parent=11 // pred_check_branch
          %211 = sbr.rel (%p209) target = $region20
        $region19: #{tpu_custom_call.1} parent=11 // pred_region
          %p212 = scmp.lt.s32.totalorder %s27, 0
          %s213 = scalar_select %p212, %s27, 0
          %s214 = smul.addr %s213, 8
          %s215 = scalar_lea.vmem %s3, %s214
        $region20: #{tpu_custom_call.1} parent=11 // pred_fallthru
          _
        // Predicated region
        $region21: #{tpu_custom_call.1} parent=11 // pred_check
          %p216 = pneg %p159
        $region22: #{tpu_custom_call.1} parent=11 // pred_check_branch
          %218 = sbr.rel (%p216) target = $region24
        $region23: #{tpu_custom_call.1} parent=11 // pred_region
          %p219 = scmp.lt.s32.totalorder %s27, 0
          %s220 = scalar_select %p219, %s27, 0
          %s221 = smul.addr %s220, 8
          %s222 = scalar_lea.vmem %s4, %s221
        $region24: #{tpu_custom_call.1} parent=11 // pred_fallthru
          _
      $region12: #{tpu_custom_call.1} parent=5 // pred_fallthru
        _
      %p223 = scmp.lt.s32.totalorder %s17, 3
      // Predicated region
      $region25: #{tpu_custom_call.1} parent=5 // pred_check
        %p224 = pneg %p223
      $region26: #{tpu_custom_call.1} parent=5 // pred_check_branch
        %226 = sbr.rel (%p224) target = $region28
      $region27: #{tpu_custom_call.1} parent=5 // pred_region
        // Predicated region
        $region29: #{tpu_custom_call.1} parent=27 // pred_check
          %p227 = pneg %p75
        $region30: #{tpu_custom_call.1} parent=27 // pred_check_branch
          %229 = sbr.rel (%p227) target = $region32
        $region31: #{tpu_custom_call.1} parent=27 // pred_region
          %s230 = sand.u32 %s65, 1
          %s231 = scalar_lea.sflag [#allocation3], %s230
          %s232 = sand.u32 %s65, 1
          %s233 = smul.addr %s232, 16
          %s234 = scalar_lea.vmem [#allocation2], %s233
          %s236 = ssub.s32 256, 256
          %237 = vsyncadd %s231, %s236
          %s238 = smul.addr %s24, 64
          %s239 = scalar_lea.hbm %s1, %s238
          %s240 = sshll.u32 %s234, 4
          %s241 = int_to_ptr.vmem [resolvable:$true] %s240
          %246 = dma.hbm_to_vmem [thread:$0]  %s239, 256, %s241, %s231, 192, 64, 4
        $region32: #{tpu_custom_call.1} parent=27 // pred_fallthru
          _
        // Predicated region
        $region33: #{tpu_custom_call.1} parent=27 // pred_check
          %p247 = pneg %p101
        $region34: #{tpu_custom_call.1} parent=27 // pred_check_branch
          %249 = sbr.rel (%p247) target = $region36
        $region35: #{tpu_custom_call.1} parent=27 // pred_region
          %p250 = scmp.lt.s32.totalorder %s24, 2
          %s251 = scalar_select %p250, %s24, 2
          %s252 = scalar_lea.vmem %s2, %s251
        $region36: #{tpu_custom_call.1} parent=27 // pred_fallthru
          _
      $region28: #{tpu_custom_call.1} parent=5 // pred_fallthru
        _
      %p253 = scmp.le.s32.totalorder 1, %s17
      %p254 = scmp.lt.s32.totalorder %s17, 4
      %p255 = pnand %p253, %p254
      %p256 = pneg %p255
      // Predicated region
      $region37: #{tpu_custom_call.1} parent=5 // pred_check
        _
      $region38: #{tpu_custom_call.1} parent=5 // pred_check_branch
        %258 = sbr.rel (%p255) target = $region40
      $region39: #{tpu_custom_call.1} parent=5 // pred_region
        %s259 = ssub.s32 %s17, 1
        %s260 = sand.u32 %s68, 1
        %s261 = scalar_lea.sflag [#allocation3], %s260
        %s262 = sand.u32 %s68, 1
        %s263 = smul.addr %s262, 16
        %s264 = scalar_lea.vmem [#allocation2], %s263
        // Predicated region
        $region41: #{tpu_custom_call.1} parent=39 // pred_check
          %p265 = pneg %p81
        $region42: #{tpu_custom_call.1} parent=39 // pred_check_branch
          %267 = sbr.rel (%p265) target = $region44
        $region43: #{tpu_custom_call.1} parent=39 // pred_region
          %268 = dma.done %s261, 256
        $region44: #{tpu_custom_call.1} parent=39 // pred_fallthru
          _
        %p269 = scmp.lt.s32.totalorder %s27, 0
        %s270 = scalar_select %p269, %s27, 0
        %s271 = smul.addr %s270, 4
        %s272 = scalar_lea.vmem %s0, %s271
        %p273 = pneg %p55
        %p274 = pneg %p52
        %s275 = sand.u32 %s68, 1
        %s276 = scalar_lea.sflag [#allocation3], %s275
        %s277 = sand.u32 %s68, 1
        %s278 = smul.addr %s277, 16
        %s279 = scalar_lea.vmem [#allocation2], %s278
        %p280 = pneg %p81
        %p281 = pneg %p78
        %p282 = scmp.lt.s32.totalorder %s26, 2
        %s283 = scalar_select %p282, %s26, 2
        %s284 = scalar_lea.vmem %s2, %s283
        %p285 = pneg %p107
        %p286 = pneg %p104
        %p287 = scmp.lt.s32.totalorder %s27, 0
        %s288 = scalar_select %p287, %s27, 0
        %s289 = smul.addr %s288, 8
        %s290 = scalar_lea.vmem %s3, %s289
        %p291 = pneg %p133
        %p292 = pneg %p130
        %p293 = scmp.lt.s32.totalorder %s27, 0
        %s294 = scalar_select %p293, %s27, 0
        %s295 = smul.addr %s294, 8
        %s296 = scalar_lea.vmem %s4, %s295
        %p297 = pneg %p159
        %p298 = pneg %p156
        %p299 = pneg %p187
        %p300 = pneg %p184
        %s301 = sand.u32 %s174, 1
        %s302 = scalar_lea.sflag [#allocation4], %s301
        %s303 = sand.u32 %s174, 1
        %s304 = smul.addr %s303, 8
        %s305 = scalar_lea.vmem [#allocation5], %s304
        %p306 = scmp.lt.s32.totalorder %s27, 0
        %s307 = scalar_select %p306, %s27, 0
        %s308 = smul.addr %s307, 4
        %s309 = scalar_lea.vmem %s0, %s308
        %p310 = scmp.lt.s32.totalorder %s26, 2
        %s311 = scalar_select %p310, %s26, 2
        %s312 = scalar_lea.vmem %s2, %s311
        %p313 = scmp.lt.s32.totalorder %s27, 0
        %s314 = scalar_select %p313, %s27, 0
        %s315 = smul.addr %s314, 8
        %s316 = scalar_lea.vmem %s3, %s315
        %p317 = scmp.lt.s32.totalorder %s27, 0
        %s318 = scalar_select %p317, %s27, 0
        %s319 = smul.addr %s318, 8
        %s320 = scalar_lea.vmem %s4, %s319
        %v322 = vld [vmem:[%s309] sm:$0xf]
        %v323 = vld [vmem:[%s264] sm:$0xf]
        %v324 = vld [vmem:[%s264 + $0x4] sm:$0xf]
        %v325 = vld [vmem:[%s264 + $0x8] sm:$0xf]
        %v326 = vld [vmem:[%s264 + $0xc] sm:$0xf]
        %v331 = vunpack.c.l.b16 %v323
        %v332 = vunpack.c.l.b16 %v324
        %v333 = vunpack.c.l.b16 %v325
        %v334 = vunpack.c.l.b16 %v326
        %v335 = vpack.c.b16 %v332, %v331
        %v336 = vpack.c.b16 %v334, %v333
        %vm339 = vcmask 261120
        %v341 = vsel %vm339, %v322, 0
        %343 = vmatprep.subr.bf16.mxu0 0
        %344 = vmatpush1.bf16.msra.mxu0 0
        %345 = vmatprep.subr.bf16.mxu0 0
        %346 = vmatpush1.bf16.msra.mxu0 0
        %347 = vmatprep.subr.bf16.mxu0 0
        %348 = vmatpush1.bf16.msra.mxu0 0
        %349 = vmatprep.subr.bf16.mxu0 0
        %350 = vmatpush1.bf16.msra.mxu0 0
        %351 = vmatprep.subr.bf16.mxu0 0
        %352 = vmatpush1.bf16.msra.mxu0 0
        %353 = vmatprep.subr.bf16.mxu0 0
        %354 = vmatpush1.bf16.msra.mxu0 0
        %355 = vmatprep.subr.bf16.mxu0 0
        %356 = vmatpush1.bf16.msra.mxu0 %v336
        %357 = vmatprep.subr.bf16.mxu0 0
        %358 = vmatpush1.bf16.msra.mxu0 %v335
        %359 = vmatprep.subr.bf16.mxu0 0
        %360 = vmatpush2.bf16.msra.mxu0 0
        %361 = vmatprep.subr.bf16.mxu0 0
        %362 = vmatpush2.bf16.msra.mxu0 0
        %363 = vmatprep.subr.bf16.mxu0 0
        %364 = vmatpush2.bf16.msra.mxu0 0
        %365 = vmatprep.subr.bf16.mxu0 0
        %366 = vmatpush2.bf16.msra.mxu0 0
        %367 = vmatprep.subr.bf16.mxu0 0
        %368 = vmatpush2.bf16.msra.mxu0 0
        %369 = vmatprep.subr.bf16.mxu0 0
        %370 = vmatpush2.bf16.msra.mxu0 0
        %371 = vmatprep.subr.bf16.mxu0 0
        %372 = vmatpush2.bf16.msra.mxu0 0
        %373 = vmatprep.subr.bf16.mxu0 0
        %374 = vmatpush2.bf16.msra.mxu0 0
        %375 = vmatprep.mubr.bf16.mxu0 0
        %376 = vmatmul.mubr.bf16.gmra.mxu0 %v341
        %v377 = vpop.f32.mrf.mxu0
        %v378 = vadd.f32 0.0, %v377
        %v379 = vpop.f32.mrf.mxu0
        %v380 = vpop.f32.mrf.mxu0
        %v381 = vpop.f32.mrf.mxu0
        %382 = vdwg.mxu0
        %v383 = vld [vmem:[%s316] sm:$0xff]
        %385 = vset.pattern.permute.xlu0 0
        %386 = vperm.xlu0 %385, %v383
        %v387 = vpop.permute.xlu0 %386
        %v389 = vmul.f32 %v378, %v387
        %v390 = vld [vmem:[%s312] sm:$0x1]
        %v392 = vlaneseq
        %v393 = vshrl.u32 %v392, 7
        %v394 = vsub.s32 0, %v393
        %v395 = vrot.slane %v390, %v394
        %v397 = vmul.f32 %v389, %v395
        %v398 = vlaneseq
        %v399 = vand.u32 %v398, 127
        %s400 = smul.u32 %s26, 128
        %v401 = vstv %s400
        %v402 = vadd.s32 %v399, %v401
        %v403 = vld [vmem:[%s320] sm:$0xff]
        %404 = vset.pattern.permute.xlu0 0
        %405 = vperm.xlu0 %404, %v403
        %v406 = vpop.permute.xlu0 %405
        %vm407 = vcmp.eq.s32.totalorder %v402, %v406
        %v408 = vsel %vm407, 12.0, 0.0
        %v409 = vsub.f32 %v397, %v408
        %410 = vst [vmem:[%s305] sm:$0xff] %v409
        %s411 = sand.u32 %s174, 1
        %s412 = scalar_lea.sflag [#allocation4], %s411
        %s413 = sand.u32 %s174, 1
        %s414 = smul.addr %s413, 8
        %s415 = scalar_lea.vmem [#allocation5], %s414
        // Predicated region
        $region45: #{tpu_custom_call.1} parent=39 // pred_check
          %p416 = pneg %p184
        $region46: #{tpu_custom_call.1} parent=39 // pred_check_branch
          %418 = sbr.rel (%p416) target = $region48
        $region47: #{tpu_custom_call.1} parent=39 // pred_region
          %s420 = ssub.s32 128, 128
          %421 = vsyncadd %s412, %s420
          %s422 = smul.addr %s27, 3
          %s423 = sadd.s32 %s26, %s422
          %s424 = smul.addr %s423, 128
          %s425 = scalar_lea.hbm %s5, %s424
          %s427 = sshll.u32 %s415, 4
          %s428 = int_to_ptr.vmem [resolvable:$true] %s427
          %430 = dma.vmem_to_hbm [thread:$0]  %s428, 128, %s425, %s412
        $region48: #{tpu_custom_call.1} parent=39 // pred_fallthru
          _
      $region40: #{tpu_custom_call.1} parent=5 // pred_fallthru
        _
      %p431 = scmp.le.s32.totalorder 2, %s17
      // Predicated region
      $region49: #{tpu_custom_call.1} parent=5 // pred_check
        %p432 = pneg %p431
      $region50: #{tpu_custom_call.1} parent=5 // pred_check_branch
        %434 = sbr.rel (%p432) target = $region52
      $region51: #{tpu_custom_call.1} parent=5 // pred_region
        %s435 = ssub.s32 %s17, 2
        // Predicated region
        $region53: #{tpu_custom_call.1} parent=51 // pred_check
          %p436 = pneg %p190
        $region54: #{tpu_custom_call.1} parent=51 // pred_check_branch
          %438 = sbr.rel (%p436) target = $region56
        $region55: #{tpu_custom_call.1} parent=51 // pred_region
          %s439 = sand.u32 %s175, 1
          %s440 = scalar_lea.sflag [#allocation4], %s439
          %s441 = sand.u32 %s175, 1
          %s442 = smul.addr %s441, 8
          %s443 = scalar_lea.vmem [#allocation5], %s442
          %444 = dma.done %s440, 128
        $region56: #{tpu_custom_call.1} parent=51 // pred_fallthru
          _
      $region52: #{tpu_custom_call.1} parent=5 // pred_fallthru
        _
    $region6: #{tpu_custom_call.1} parent=1 // loop_footer
      %s21 = sadd.s32 1, %s17
    $region7: #{tpu_custom_call.1} parent=1 // loop_footer_branch
      %16 = sbr.rel target = $region3
    $region8: #{tpu_custom_call.1} parent=1 // loop_exit
      _
    %445 = vsyncpa [#allocation3], 1
    %s446 = scalar_lea.sflag [#allocation3], 1
    %447 = vsyncpa %s446, 1
    %448 = vsyncpa [#allocation4], 1
    %s449 = scalar_lea.sflag [#allocation4], 1
    %450 = vsyncpa %s449, 1

</llo_original>
